<compile_context>
chip_gen: v6e
topology: v6e:2x2x1
jax: 0.10.0
libtpu: 0.0.40
codegen_flags: <defaults>
</compile_context>

<pallas_src>
import functools

import numpy as np
import jax
import jax.numpy as jnp
from jax.experimental import pallas as pl
from jax.experimental.pallas import tpu as pltpu


def _copy_kernel(x_ref, o_ref):
    # Pure pass-through of the current lane-dense (tile_r, lane) tile.
    o_ref[...] = x_ref[...]


# 3 MiB per tile -> 4 x tile = 12 MiB resident with input+output double
# buffering: safe against the default scoped-VMEM limit on every generation
# (16 MiB v5e / 32 MiB v6e / 32-of-64 MiB v7x), while a copy's per-step
# overhead (~0.35 us) stays small next to the ~2-4 us tile round-trip.
_TILE_BYTES_BUDGET = 3 << 20

_LANES = (32768, 16384, 8192, 4096, 2048, 1024, 512, 256, 128)


def _pick_factorization(total, sublane_align):
    """Return (lane, rows): the widest lane-dense last dim (multiple of 128)
    dividing `total`, preferring a row count that is sublane-aligned and big
    enough to split into >= 2 tiles (so v7x can shard across its 2 TCs)."""
    best = None  # (tier, lane, rows)
    for lane in _LANES:
        if total % lane:
            continue
        rows = total // lane
        if rows % sublane_align == 0:
            tier = 2 if rows >= 2 * sublane_align else 1
        else:
            tier = 0
        if best is None or tier > best[0]:
            best = (tier, lane, rows)
        if tier == 2:
            break  # descending scan: this is the widest lane reaching tier 2
    if best is None:
        return None, None
    return best[1], best[2]


def _divisors(n):
    ds = set()
    d = 1
    while d * d <= n:
        if n % d == 0:
            ds.add(d)
            ds.add(n // d)
        d += 1
    return sorted(ds)


def _pick_tile_rows(rows, sublane_align, max_rows):
    """Largest exact divisor of `rows` that (a) keeps the block layout-legal
    (multiple of the sublane alignment, or the full extent), (b) fits the
    per-tile VMEM budget, and (c) yields >= 2 grid steps whenever rows is big
    enough — so the 'parallel' axis actually feeds both v7x TensorCores."""
    divisors = _divisors(rows)
    want_two_steps = rows >= 2 * sublane_align

    def legal(d):
        return d % sublane_align == 0 or d == rows

    cands = [d for d in divisors
             if legal(d) and d <= max_rows and (rows // d >= 2 or not want_two_steps)]
    if cands:
        return max(cands)
    cands = [d for d in divisors if legal(d) and d <= max_rows]
    if cands:
        return max(cands)
    # TODO(synk): rows with no sublane-aligned divisor under budget (e.g. a huge
    # prime) falls back to one full-extent block; pad rows too if this bites.
    return rows


def _materializing_copy(x):
    """Pallas HBM->HBM copy of x (lane-dense, divisor-exact tiling, aliased
    output).  Call under jit with donate_argnums=0 so the aliasing is truly
    in-place; without donation XLA inserts a defensive copy of x first."""
    total = x.size
    if total == 0:
        return x

    itemsize = jnp.dtype(x.dtype).itemsize
    sublane_align = max(8, 32 // itemsize)  # 8 for f32, 16 for bf16, 32 for int8/fp8

    flat = x.reshape(-1)
    pad = (-total) % 128
    padded_total = total + pad
    if pad:
        # Non-128-multiple size: pad the tail (<= 127 elems of extra traffic)
        # and reuse the tiled path instead of one giant whole-array VMEM block.
        flat = jnp.pad(flat, (0, pad))

    lane, rows = _pick_factorization(padded_total, sublane_align)
    flat2d = flat.reshape(rows, lane)

    max_rows = max(1, _TILE_BYTES_BUDGET // (lane * itemsize))
    tile_r = _pick_tile_rows(rows, sublane_align, max_rows)
    grid = rows // tile_r  # exact: tile_r divides rows -> no ragged final block

    out = pl.pallas_call(
        _copy_kernel,
        out_shape=jax.ShapeDtypeStruct((rows, lane), x.dtype),
        grid=(grid,),
        in_specs=[pl.BlockSpec((tile_r, lane), lambda i: (i, 0))],
        out_specs=pl.BlockSpec((tile_r, lane), lambda i: (i, 0)),
        input_output_aliases={0: 0},
        compiler_params=pltpu.CompilerParams(
            # >= 2 grid steps whenever possible, so v7x shards the copy across
            # both TensorCores; no-op on single-TC v5e / v6e.
            dimension_semantics=("parallel",),
        ),
    )(flat2d)

    out = out.reshape(-1)
    if pad:
        out = out[:total]
    return out.reshape(x.shape)


def synthesis_network_forward(x, *, materialize=False):
    """SynthesisNetwork.forward == identity.

    Default path launches no kernel at all (zero HBM traffic) — the only
    correct "optimization" for an identity op.  Set materialize=True only if a
    physically distinct, freshly written output buffer is required; in that
    case call under jax.jit(..., donate_argnums=0).
    """
    if not materialize:
        return x
    return _materializing_copy(x)


# TODO(synk): the reference __init__ takes `configs` but defines no parameters;
# nothing to initialize.  If the real synthesis network gains conv/matmul
# layers, this tiling must be redesigned around MXU-friendly (M,K)x(K,N) blocks.


if __name__ == "__main__":
    key = jax.random.PRNGKey(0)
    x = jax.random.normal(key, (2, 4, 16, 16), dtype=jnp.float32)
    x_host = np.asarray(x)  # host copy: x is donated to the Pallas copy below

    # Primary path: identity, no kernel launched, zero HBM traffic.
    y = synthesis_network_forward(x)
    jax.block_until_ready(y)
    assert y.shape == x.shape and y.dtype == x.dtype

    # Materializing Pallas path, exercised once to verify it compiles and runs
    # on TPU.  Donation makes the aliased copy genuinely in-place.
    copy_fn = jax.jit(
        functools.partial(synthesis_network_forward, materialize=True),
        donate_argnums=0,
    )
    z = copy_fn(x)
    jax.block_until_ready(z)

    assert z.shape == x_host.shape and z.dtype == x_host.dtype
    np.testing.assert_array_equal(np.asarray(z), x_host)

    print("KERNEL_OK")
</pallas_src>

<mosaic_0001>
module attributes {stable_mosaic.version = 11 : i64} {
  func.func @_copy_kernel(%arg0: i32, %arg1: memref<8x128xf32, #tpu.memory_space<vmem>>, %arg2: memref<8x128xf32, #tpu.memory_space<vmem>>) attributes {dimension_semantics = [#tpu.dimension_semantics<parallel>], iteration_bounds = array<i64: 2>, scalar_prefetch = 0 : i64, scratch_operands = 0 : i64, tpu.core_type = #tpu.core_type<tc>, window_params = [{transform_indices = @transform_0, window_bounds = array<i64: 8, 128>}, {transform_indices = @transform_1, window_bounds = array<i64: 8, 128>}]} {
    %c0 = arith.constant 0 : index
    %c0_0 = arith.constant 0 : index
    %0 = vector.load %arg1[%c0, %c0_0] : memref<8x128xf32, #tpu.memory_space<vmem>>, vector<8x128xf32>
    %c0_1 = arith.constant 0 : index
    %c0_2 = arith.constant 0 : index
    %1 = vector.load %arg2[%c0_1, %c0_2] : memref<8x128xf32, #tpu.memory_space<vmem>>, vector<8x128xf32>
    tpu.vector_store %arg2[%c0_1, %c0_2], %0 {strides = array<i32>} : memref<8x128xf32, #tpu.memory_space<vmem>>, vector<8x128xf32>,
    return
  }
  func.func @transform_0(%arg0: i32) -> (i32, i32) {
    %c0_i32 = arith.constant 0 : i32
    %c0_i32_0 = arith.constant 0 : i32
    return %arg0, %c0_i32 : i32, i32
  }
  func.func @transform_1(%arg0: i32) -> (i32, i32) {
    %c0_i32 = arith.constant 0 : i32
    %c0_i32_0 = arith.constant 0 : i32
    return %arg0, %c0_i32 : i32, i32
  }
}

</mosaic_0001>

<llo_original>
// kernel: synthesis_network_forward.1
$region0: #{synthesis_network_forward.1}
  #allocation0 [shape = 'u32[]', space=smem, size = 0x4, offset = 0x4, fixed_abs, tag = 'smem constant byte address 0x4 - core index']
  #allocation1 [shape = 'u32[144,128]{1,0:T(1,128)}', space=vmem, size = 0x12000, scoped, tag = 'internal scratch']
  %s0 = inlined_call_operand.vmem [shape: f32[16,128], index: 0, kind: input, shape index: {}, may-alias: {0,1}]
  %s1 = inlined_call_operand.vmem [shape: f32[16,128], index: 1, kind: output, shape index: {}, may-alias: {0,1}]
  %s2 = sld [smem:[#allocation0]]
  $region37: #{synthesis_network_forward.1} parent=0
    _
  %s4 = ssub.s32 1, %s2
  %s5 = scalar_select 0, %s4, %s2
  loop: start=0, step=1, limit=4
  $region2: #{synthesis_network_forward.1} parent=0 // loop_pre_header
    _
  $region3: #{synthesis_network_forward.1} parent=0 // loop_header
    %s7 = sphi 0, %s11
    %p8 = scmp.ge.s32.totalorder %s7, 4
    %s17 = sphi 0, %s19
    %s20 = sphi 0, %s17
    %s21 = sphi 0, %s20
    %s37 = sphi 0, %s21
    %s43 = sphi 0, %s45
    %s46 = sphi 0, %s43
    %s47 = sphi 0, %s46
    %s63 = sphi 0, %s47
  $region4: #{synthesis_network_forward.1} parent=0 // loop_header_branch
    %10 = sbr.rel (%p8) target = $region8
  $region5: #{synthesis_network_forward.1} parent=0 // loop_body
    %s12 = ssub.s32 %s7, 1
    %s13 = ssub.s32 %s7, 2
    %s14 = sadd.s32 %s7, 1
    %s15 = ssub.s32 %s7, %s14
    %p16 = scmp.eq.s32.totalorder %s15, 0
    %s18 = sadd.s32 %s17, 1
    %s19 = scalar_select %p16, %s17, %s18
    %p22 = pneg %p16
    %p23 = scmp.eq.s32.totalorder %s7, 1
    %p24 = por %p22, %p23
    %p25 = scmp.ne.s32.totalorder %s17, %s20
    %p26 = scmp.eq.s32.totalorder %s7, 0
    %p27 = por %p25, %p26
    %p28 = scmp.ne.s32.totalorder %s17, %s20
    %p29 = scmp.eq.s32.totalorder %s12, 1
    %p30 = por %p28, %p29
    %p31 = scmp.ne.s32.totalorder %s20, %s21
    %p32 = scmp.eq.s32.totalorder %s12, 0
    %p33 = por %p31, %p32
    %p34 = scmp.ne.s32.totalorder %s20, %s21
    %p35 = scmp.eq.s32.totalorder %s13, 1
    %p36 = por %p34, %p35
    %p38 = scmp.ne.s32.totalorder %s21, %s37
    %p39 = scmp.eq.s32.totalorder %s13, 0
    %p40 = por %p38, %p39
    %s41 = ssub.s32 %s7, %s14
    %p42 = scmp.eq.s32.totalorder %s41, 0
    %s44 = sadd.s32 %s43, 1
    %s45 = scalar_select %p42, %s43, %s44
    %p48 = pneg %p42
    %p49 = scmp.eq.s32.totalorder %s7, 1
    %p50 = por %p48, %p49
    %p51 = scmp.ne.s32.totalorder %s43, %s46
    %p52 = scmp.eq.s32.totalorder %s7, 0
    %p53 = por %p51, %p52
    %p54 = scmp.ne.s32.totalorder %s43, %s46
    %p55 = scmp.eq.s32.totalorder %s12, 1
    %p56 = por %p54, %p55
    %p57 = scmp.ne.s32.totalorder %s46, %s47
    %p58 = scmp.eq.s32.totalorder %s12, 0
    %p59 = por %p57, %p58
    %p60 = scmp.ne.s32.totalorder %s46, %s47
    %p61 = scmp.eq.s32.totalorder %s13, 1
    %p62 = por %p60, %p61
    %p64 = scmp.ne.s32.totalorder %s47, %s63
    %p65 = scmp.eq.s32.totalorder %s13, 0
    %p66 = por %p64, %p65
    %p67 = scmp.le.s32.totalorder 1, %s7
    %p68 = scmp.lt.s32.totalorder %s7, 3
    %p69 = pnand %p67, %p68
    %p70 = pneg %p69
    // Predicated region
    $region9: #{synthesis_network_forward.1} parent=5 // pred_check
      _
    $region10: #{synthesis_network_forward.1} parent=5 // pred_check_branch
      %72 = sbr.rel (%p69) target = $region12
    $region11: #{synthesis_network_forward.1} parent=5 // pred_region
      %s73 = ssub.s32 %s7, 1
    $region12: #{synthesis_network_forward.1} parent=5 // pred_fallthru
      _
    %p74 = scmp.lt.s32.totalorder %s7, 2
    // Predicated region
    $region13: #{synthesis_network_forward.1} parent=5 // pred_check
      %p75 = pneg %p74
    $region14: #{synthesis_network_forward.1} parent=5 // pred_check_branch
      %77 = sbr.rel (%p75) target = $region16
    $region15: #{synthesis_network_forward.1} parent=5 // pred_region
      // Predicated region
      $region17: #{synthesis_network_forward.1} parent=15 // pred_check
        %p78 = pneg %p27
      $region18: #{synthesis_network_forward.1} parent=15 // pred_check_branch
        %80 = sbr.rel (%p78) target = $region20
      $region19: #{synthesis_network_forward.1} parent=15 // pred_region
        %p81 = scmp.lt.s32.totalorder %s7, 1
        %s82 = scalar_select %p81, %s7, 1
        %s83 = smul.addr %s82, 8
        %s84 = scalar_lea.vmem %s0, %s83
      $region20: #{synthesis_network_forward.1} parent=15 // pred_fallthru
        _
    $region16: #{synthesis_network_forward.1} parent=5 // pred_fallthru
      _
    %p85 = scmp.le.s32.totalorder 1, %s7
    %p86 = scmp.lt.s32.totalorder %s7, 3
    %p87 = pnand %p85, %p86
    %p88 = pneg %p87
    // Predicated region
    $region21: #{synthesis_network_forward.1} parent=5 // pred_check
      _
    $region22: #{synthesis_network_forward.1} parent=5 // pred_check_branch
      %90 = sbr.rel (%p87) target = $region24
    $region23: #{synthesis_network_forward.1} parent=5 // pred_region
      %s91 = ssub.s32 %s7, 1
      %p92 = scmp.lt.s32.totalorder %s12, 1
      %s93 = scalar_select %p92, %s12, 1
      %s94 = smul.addr %s93, 8
      %s95 = scalar_lea.vmem %s0, %s94
      %p96 = pneg %p33
      %p97 = pneg %p30
      %p98 = pneg %p59
      %p99 = pneg %p56
      %p100 = scmp.lt.s32.totalorder %s12, 1
      %s101 = scalar_select %p100, %s12, 1
      %s102 = smul.addr %s101, 8
      %s103 = scalar_lea.vmem %s1, %s102
      %p104 = scmp.lt.s32.totalorder %s12, 1
      %s105 = scalar_select %p104, %s12, 1
      %s106 = smul.addr %s105, 8
      %s107 = scalar_lea.vmem %s0, %s106
      %p108 = scmp.lt.s32.totalorder %s12, 1
      %s109 = scalar_select %p108, %s12, 1
      %s110 = smul.addr %s109, 8
      %s111 = scalar_lea.vmem %s1, %s110
      %v112 = vld [vmem:[%s107] sm:$0xff]
      %113 = vst [vmem:[%s111] sm:$0xff] %v112
      %p114 = scmp.lt.s32.totalorder %s12, 1
      %s115 = scalar_select %p114, %s12, 1
      %s116 = smul.addr %s115, 8
      %s117 = scalar_lea.vmem %s1, %s116
      // Predicated region
      $region25: #{synthesis_network_forward.1} parent=23 // pred_check
        %p118 = pneg %p56
      $region26: #{synthesis_network_forward.1} parent=23 // pred_check_branch
        %120 = sbr.rel (%p118) target = $region28
      $region27: #{synthesis_network_forward.1} parent=23 // pred_region
        _
      $region28: #{synthesis_network_forward.1} parent=23 // pred_fallthru
        _
    $region24: #{synthesis_network_forward.1} parent=5 // pred_fallthru
      _
    %p121 = scmp.le.s32.totalorder 2, %s7
    // Predicated region
    $region29: #{synthesis_network_forward.1} parent=5 // pred_check
      %p122 = pneg %p121
    $region30: #{synthesis_network_forward.1} parent=5 // pred_check_branch
      %124 = sbr.rel (%p122) target = $region32
    $region31: #{synthesis_network_forward.1} parent=5 // pred_region
      %s125 = ssub.s32 %s7, 2
      // Predicated region
      $region33: #{synthesis_network_forward.1} parent=31 // pred_check
        %p126 = pneg %p62
      $region34: #{synthesis_network_forward.1} parent=31 // pred_check_branch
        %128 = sbr.rel (%p126) target = $region36
      $region35: #{synthesis_network_forward.1} parent=31 // pred_region
        %p129 = scmp.lt.s32.totalorder %s13, 1
        %s130 = scalar_select %p129, %s13, 1
        %s131 = smul.addr %s130, 8
        %s132 = scalar_lea.vmem %s1, %s131
      $region36: #{synthesis_network_forward.1} parent=31 // pred_fallthru
        _
    $region32: #{synthesis_network_forward.1} parent=5 // pred_fallthru
      _
  $region6: #{synthesis_network_forward.1} parent=0 // loop_footer
    %s11 = sadd.s32 1, %s7
  $region7: #{synthesis_network_forward.1} parent=0 // loop_footer_branch
    %6 = sbr.rel target = $region3
  $region8: #{synthesis_network_forward.1} parent=0 // loop_exit
    _

</llo_original>
